<compile_context>
chip_gen: v6e
topology: v6e:2x2x1
jax: 0.10.0
libtpu: 0.0.40
codegen_flags: <defaults>
</compile_context>

<pallas_src>
import functools

import jax
import jax.numpy as jnp
import numpy as np
from jax.experimental import pallas as pl
from jax.experimental.pallas import tpu as pltpu

NEG = -1e30  # "minus infinity" that stays finite under repeated addition


# --------------------------------------------------------------------------
# Phase 1: fused log-softmax + blank / target-emission gather (tiled over T)
# --------------------------------------------------------------------------
def _softmax_gather_kernel(logits_ref, tgt_ref, blank_ref, emit_ref, *, blank_idx):
    """One (rows_t, U1, C) slab of joiner logits -> lane-dense log-prob planes.

    logits_ref: (rows_t, U1, C)   joiner logits (any float dtype; upcast here)
    tgt_ref:    (U1, 1) int32     target label owning each u column (pad -> 0)
    blank_ref:  (rows_t, U1) f32  out: log P(blank      | t, u)
    emit_ref:   (rows_t, U1) f32  out: log P(target[u]  | t, u)
    """
    x = logits_ref[...].astype(jnp.float32)                      # (rows, U1, C)
    m = jnp.max(x, axis=-1, keepdims=True)                       # (rows, U1, 1)
    lse = jnp.log(jnp.sum(jnp.exp(x - m), axis=-1, keepdims=True)) + m

    # Gathers via compare + select + lane-sum on the *raw* logits: exact (no
    # exp underflow for the blank), and the full (rows, U1, C) log-prob tensor
    # is never materialised.
    c_iota = jax.lax.broadcasted_iota(jnp.int32, x.shape, 2)
    blank_x = jnp.sum(jnp.where(c_iota == blank_idx, x, 0.0),
                      axis=-1, keepdims=True)                    # (rows, U1, 1)
    emit_x = jnp.sum(jnp.where(c_iota == tgt_ref[...], x, 0.0),
                     axis=-1, keepdims=True)                     # (rows, U1, 1)

    # Lane-dense (rows, U1) stores: the only relayout is on the small reduced
    # values, never on the (rows, U1, C) slab.
    blank_ref[...] = jnp.squeeze(blank_x - lse, -1)
    emit_ref[...] = jnp.squeeze(emit_x - lse, -1)


# --------------------------------------------------------------------------
# Phase 2: banded (anti-diagonal-per-row) alpha DP, K utterances per step
# --------------------------------------------------------------------------
def _rnnt_dp_kernel(lt_ref, lu_ref, blank_ref, emit_ref, loss_ref):
    """Transducer forward DP for K packed utterances, in skewed layout.

    blank_ref / emit_ref: (D, K, U1) f32 where row d holds anti-diagonal d of
    utterance k, i.e. skew[d, k, u] = lp[k][d - u, u] (NEG where t = d - u is
    out of range).  loss_ref: (K, 1) f32 per-utterance costs.
    """
    g = pl.program_id(0)
    D, K, U1 = blank_ref.shape
    neg = jnp.float32(NEG)

    # Per-utterance diagonal counts / final label positions from SMEM scalars.
    row_iota = jax.lax.broadcasted_iota(jnp.int32, (K, 1), 0)
    ends = jnp.zeros((K, 1), jnp.int32)          # ends[k] = Tb_k + Ub_k
    ubs = jnp.zeros((K, 1), jnp.int32)           # ubs[k]  = Ub_k
    max_end = jnp.int32(1)
    for k in range(K):                           # K is a small static constant
        t_k = lt_ref[g * K + k]
        u_k = lu_ref[g * K + k]
        e_k = t_k + u_k
        ends = jnp.where(row_iota == k, e_k, ends)
        ubs = jnp.where(row_iota == k, u_k, ubs)
        max_end = jnp.maximum(max_end, e_k)

    lane = jax.lax.broadcasted_iota(jnp.int32, (K, U1), 1)
    alpha0 = jnp.where(lane == 0, jnp.float32(0.0), neg)   # alpha on diagonal 0
    negcol = jnp.full((K, 1), neg, jnp.float32)
    fin0 = jnp.zeros((K, 1), jnp.float32)

    def body(d, carry):
        alpha, fin = carry                       # alpha[k, u] = alpha_k[d-1-u, u]
        bl = blank_ref[d - 1]                    # (K, U1): blank_lp on diag d-1
        em = emit_ref[d - 1]                     # (K, U1): emit_lp  on diag d-1
        top = alpha + bl                         # blank transition (t-1,u)->(t,u)
        left = jnp.concatenate([negcol, (alpha + em)[:, :U1 - 1]], axis=1)
        mx = jnp.maximum(top, left)
        mn = jnp.minimum(top, left)
        new = mx + jnp.log(1.0 + jnp.exp(mn - mx))           # one-exp logsumexp
        # Capture the cost of utterance k at d == Tb_k + Ub_k:
        #   alpha[Tb-1, Ub] + blank_lp[Tb-1, Ub] == top[k, Ub] at that step.
        cand = jnp.sum(jnp.where(lane == ubs, top, 0.0), axis=1, keepdims=True)
        fin = jnp.where(d == ends, cand, fin)
        alpha = jnp.where(d < ends, new, alpha)  # freeze finished utterances
        return alpha, fin

    # TODO(synk): block the diagonal loop in chunks of 8 rows with an unrolled
    #             inner loop once the trip count can be made static.
    _, fin = jax.lax.fori_loop(1, max_end + 1, body, (alpha0, fin0))
    loss_ref[...] = -fin


# --------------------------------------------------------------------------
# Wrapper
# --------------------------------------------------------------------------
def rnnt_loss_pallas(logits, targets, logit_lengths, target_lengths,
                     blank=-1, reduction="mean"):
    if reduction not in ("none", "mean", "sum"):
        raise ValueError("reduction should be one of 'none', 'mean', or 'sum'")
    B, T, U1, C = logits.shape
    U = targets.shape[1]
    assert U1 == U + 1, "logits target dim must be max_target_length + 1"
    blank_idx = blank if blank >= 0 else C + blank

    lt = logit_lengths.astype(jnp.int32)
    lu = target_lengths.astype(jnp.int32)
    negf = jnp.float32(NEG)

    # ---------------- Phase 1: blank / emission log-prob planes ----------------
    # Padded targets shaped (B, U1, 1) so the kernel gets a (U1, 1) sublane
    # vector directly (no (B, T*U1) HBM materialisation, no in-kernel relayout).
    tgt_pad = jnp.pad(targets.astype(jnp.int32), ((0, 0), (0, 1)))[:, :, None]

    itemsize = np.dtype(logits.dtype).itemsize
    # Live VMEM per T-row of a tile: double-buffered input + f32 upcast /
    # exp / mask temporaries + double-buffered f32 output rows.
    per_row = U1 * C * (2 * itemsize + 16) + 4 * U1 * 4
    vmem_budget = 36 * 1024 * 1024          # leaves headroom on v7x (64 MiB/TC)
    rows_cap = max(1, vmem_budget // per_row)
    if rows_cap >= T:
        rows_t = T
    else:
        # Output block 2nd-minor dim must be a multiple of 8 (or the full T).
        rows_t = min(max(8, (rows_cap // 8) * 8), T)
    # TODO(synk): if U1*C alone blows the budget (huge vocab), tile U1 or C
    #             (two-pass online softmax) instead of clamping to 8 rows.
    nT = pl.cdiv(T, rows_t)

    kernel1 = functools.partial(_softmax_gather_kernel, blank_idx=blank_idx)
    blank_lp, emit_lp = pl.pallas_call(
        kernel1,
        out_shape=(jax.ShapeDtypeStruct((B, T, U1), jnp.float32),
                   jax.ShapeDtypeStruct((B, T, U1), jnp.float32)),
        grid=(B, nT),
        in_specs=[
            pl.BlockSpec((None, rows_t, U1, C), lambda b, ti: (b, ti, 0, 0)),
            pl.BlockSpec((None, U1, 1), lambda b, ti: (b, 0, 0)),
        ],
        out_specs=(pl.BlockSpec((None, rows_t, U1), lambda b, ti: (b, ti, 0)),
                   pl.BlockSpec((None, rows_t, U1), lambda b, ti: (b, ti, 0))),
        compiler_params=pltpu.CompilerParams(
            dimension_semantics=("parallel", "parallel"),
            vmem_limit_bytes=48 * 1024 * 1024),
    )(logits, tgt_pad)

    # ---- layout plumbing: skew so anti-diagonal d becomes a contiguous row ----
    # skew[b, d, u] = lp[b, d - u, u] (NEG where t = d - u is out of [0, T)).
    # TODO(synk): fold this skew into Phase 2 with a strided pltpu.roll so the
    #             HBM round trip + XLA gather disappear.
    D = T + U1
    pad_rows = jnp.full((B, U1, U1), negf, jnp.float32)
    didx = (jnp.arange(D)[:, None] - jnp.arange(U1)[None, :]) % D      # (D, U1)
    gidx = jnp.broadcast_to(didx[None], (B, D, U1))
    skew_blank = jnp.take_along_axis(
        jnp.concatenate([blank_lp, pad_rows], axis=1), gidx, axis=1)
    skew_emit = jnp.take_along_axis(
        jnp.concatenate([emit_lp, pad_rows], axis=1), gidx, axis=1)

    # Pack K utterances per Phase-2 grid step (K on the sublane axis of the DP
    # state).  Pad the batch so every group is full; padded rows have length 0
    # and never update or capture anything.
    K = min(8, B)
    Bp = ((B + K - 1) // K) * K
    G = Bp // K
    if Bp != B:
        bpad = jnp.full((Bp - B, D, U1), negf, jnp.float32)
        skew_blank = jnp.concatenate([skew_blank, bpad], axis=0)
        skew_emit = jnp.concatenate([skew_emit, bpad], axis=0)
    skew_blank = skew_blank.reshape(G, K, D, U1).transpose(0, 2, 1, 3)  # (G,D,K,U1)
    skew_emit = skew_emit.reshape(G, K, D, U1).transpose(0, 2, 1, 3)
    lt_pad = jnp.pad(lt, (0, Bp - B))
    lu_pad = jnp.pad(lu, (0, Bp - B))

    # VMEM for the two double-buffered skewed planes per group.
    # TODO(synk): chunk the D axis (manual double buffer) for very long T on
    #             v7x, where 64 MiB/TC may not hold both full planes.
    p2_bytes = 2 * 2 * D * K * U1 * 4
    vmem2 = int(min(96 * 2 ** 20, max(32 * 2 ** 20, p2_bytes + 8 * 2 ** 20)))

    # ---- Phase 2: per-diagonal alpha DP, K utterances per grid step ----
    costs2d = pl.pallas_call(
        _rnnt_dp_kernel,
        out_shape=jax.ShapeDtypeStruct((Bp, 1), jnp.float32),
        grid_spec=pltpu.PrefetchScalarGridSpec(
            num_scalar_prefetch=2,       # logit_lengths, target_lengths -> SMEM
            grid=(G,),
            in_specs=[
                pl.BlockSpec((None, D, K, U1), lambda g, lt_s, lu_s: (g, 0, 0, 0)),
                pl.BlockSpec((None, D, K, U1), lambda g, lt_s, lu_s: (g, 0, 0, 0)),
            ],
            out_specs=pl.BlockSpec((K, 1), lambda g, lt_s, lu_s: (g, 0)),
        ),
        compiler_params=pltpu.CompilerParams(
            dimension_semantics=("parallel",),
            vmem_limit_bytes=vmem2),
    )(lt_pad, lu_pad, skew_blank, skew_emit)

    costs = costs2d[:B, 0]
    if reduction == "mean":
        return costs.mean()   # torchaudio semantics: mean over the batch
    if reduction == "sum":
        return costs.sum()
    return costs


def rnnt_loss(logits, targets, logit_lengths, target_lengths, blank=-1,
              clamp=-1.0, fused_log_softmax=True, reuse_logits_for_grads=True,
              reduction="mean"):
    """JAX/Pallas equivalent of torchaudio.prototype.rnnt_loss (forward only)."""
    del clamp, reuse_logits_for_grads  # gradient-only options (forward pass)
    # fused_log_softmax=False: the caller already applied log_softmax; the
    # kernel's fused normalisation is idempotent on log-probabilities, so the
    # logits are passed straight through (no redundant XLA log_softmax pass).
    del fused_log_softmax
    return rnnt_loss_pallas(logits, targets, logit_lengths, target_lengths,
                            blank=blank, reduction=reduction)


class RNNTLoss:
    """JAX/Pallas equivalent of torchaudio.prototype.RNNTLoss (forward only)."""

    def __init__(self, blank=-1, clamp=-1.0, fused_log_softmax=True,
                 reuse_logits_for_grads=True, reduction="mean"):
        self.blank = blank
        self.clamp = clamp                    # gradient-only option; unused in fwd
        self.fused_log_softmax = fused_log_softmax
        self.reuse_logits_for_grads = reuse_logits_for_grads
        self.reduction = reduction

    def __call__(self, logits, targets, logit_lengths, target_lengths):
        return rnnt_loss(logits, targets, logit_lengths, target_lengths,
                         blank=self.blank, clamp=self.clamp,
                         fused_log_softmax=self.fused_log_softmax,
                         reuse_logits_for_grads=self.reuse_logits_for_grads,
                         reduction=self.reduction)


# --------------------------------------------------------------------------
# Reference + demo
# --------------------------------------------------------------------------
def _reference_costs(logits, targets, lt, lu, blank_idx):
    """Pure numpy reference (Graves 2012 forward recursion)."""
    logits = np.asarray(logits, np.float64)
    m = logits.max(-1, keepdims=True)
    logp = logits - (np.log(np.exp(logits - m).sum(-1, keepdims=True)) + m)
    B = logits.shape[0]
    costs = np.zeros((B,), np.float64)
    for b in range(B):
        Tb, Ub = int(lt[b]), int(lu[b])
        alpha = np.full((Tb, Ub + 1), -np.inf)
        alpha[0, 0] = 0.0
        for t in range(Tb):
            for u in range(Ub + 1):
                if t == 0 and u == 0:
                    continue
                cands = []
                if t > 0:
                    cands.append(alpha[t - 1, u] + logp[b, t - 1, u, blank_idx])
                if u > 0:
                    cands.append(alpha[t, u - 1] + logp[b, t, u - 1, int(targets[b, u - 1])])
                alpha[t, u] = np.logaddexp.reduce(cands)
        costs[b] = -(alpha[Tb - 1, Ub] + logp[b, Tb - 1, Ub, blank_idx])
    return costs


if __name__ == "__main__":
    key = jax.random.PRNGKey(0)
    k1, k2 = jax.random.split(key)

    B, T, U, C = 2, 8, 4, 16          # batch, time, max target length, classes
    logits = jax.random.normal(k1, (B, T, U + 1, C), dtype=jnp.float32)
    targets = jax.random.randint(k2, (B, U), 1, C - 1, dtype=jnp.int32)
    logit_lengths = jnp.array([T, T - 2], dtype=jnp.int32)
    target_lengths = jnp.array([U, U - 1], dtype=jnp.int32)

    loss_mod = RNNTLoss(blank=-1, reduction="mean")
    loss = loss_mod(logits, targets, logit_lengths, target_lengths)
    loss = jax.block_until_ready(loss)

    # also fetch per-sample costs for verification
    costs = jax.block_until_ready(
        rnnt_loss_pallas(logits, targets, logit_lengths, target_lengths,
                         blank=-1, reduction="none"))

    ref = _reference_costs(np.asarray(logits), np.asarray(targets),
                           np.asarray(logit_lengths), np.asarray(target_lengths),
                           blank_idx=C - 1)
    np.testing.assert_allclose(np.asarray(costs), ref, rtol=1e-3, atol=1e-3)
    np.testing.assert_allclose(float(loss), ref.mean(), rtol=1e-3, atol=1e-3)

    print("KERNEL_OK")
</pallas_src>

<mosaic_0001>
module attributes {stable_mosaic.version = 11 : i64} {
  func.func @_softmax_gather_kernel(%arg0: i32, %arg1: i32, %arg2: memref<1x8x5x16xf32, #tpu.memory_space<vmem>>, %arg3: memref<1x5x1xi32, #tpu.memory_space<vmem>>, %arg4: memref<1x8x5xf32, #tpu.memory_space<vmem>>, %arg5: memref<1x8x5xf32, #tpu.memory_space<vmem>>) attributes {dimension_semantics = [#tpu.dimension_semantics<parallel>, #tpu.dimension_semantics<parallel>], iteration_bounds = array<i64: 2, 1>, scalar_prefetch = 0 : i64, scratch_operands = 0 : i64, tpu.core_type = #tpu.core_type<tc>, window_params = [{transform_indices = @transform_0, window_bounds = array<i64: 1, 8, 5, 16>}, {transform_indices = @transform_1, window_bounds = array<i64: 1, 5, 1>}, {transform_indices = @transform_2, window_bounds = array<i64: 1, 8, 5>}, {transform_indices = @transform_3, window_bounds = array<i64: 1, 8, 5>}]} {
    %c0 = arith.constant 0 : index
    %c0_0 = arith.constant 0 : index
    %c0_1 = arith.constant 0 : index
    %c0_2 = arith.constant 0 : index
    %0 = vector.load %arg2[%c0, %c0_0, %c0_1, %c0_2] : memref<1x8x5x16xf32, #tpu.memory_space<vmem>>, vector<1x8x5x16xf32>
    %1 = vector.shape_cast %0 : vector<1x8x5x16xf32> to vector<8x5x16xf32>
    %cst = arith.constant dense<0xFF800000> : vector<8x5xf32>
    %2 = vector.multi_reduction <maximumf>, %1, %cst [2] : vector<8x5x16xf32> to vector<8x5xf32>
    %3 = vector.shape_cast %2 : vector<8x5xf32> to vector<8x5x1xf32>
    %4 = vector.broadcast %3 : vector<8x5x1xf32> to vector<8x5x16xf32>
    %5 = arith.subf %1, %4 : vector<8x5x16xf32>
    %6 = math.exp %5 : vector<8x5x16xf32>
    %cst_3 = arith.constant dense<0.000000e+00> : vector<8x5xf32>
    %7 = vector.multi_reduction <add>, %6, %cst_3 [2] : vector<8x5x16xf32> to vector<8x5xf32>
    %8 = vector.shape_cast %7 : vector<8x5xf32> to vector<8x5x1xf32>
    %9 = math.log %8 : vector<8x5x1xf32>
    %10 = arith.addf %9, %3 : vector<8x5x1xf32>
    %11 = tpu.iota {dimensions = array<i32: 2>} : vector<8x5x16xi32>
    %c15_i32 = arith.constant 15 : i32
    %12 = vector.broadcast %c15_i32 : i32 to vector<8x5x16xi32>
    %13 = arith.cmpi eq, %11, %12 : vector<8x5x16xi32>
    %cst_4 = arith.constant 0.000000e+00 : f32
    %14 = vector.broadcast %cst_4 : f32 to vector<8x5x16xf32>
    %15 = arith.select %13, %1, %14 : vector<8x5x16xi1>, vector<8x5x16xf32>
    %cst_5 = arith.constant dense<0.000000e+00> : vector<8x5xf32>
    %16 = vector.multi_reduction <add>, %15, %cst_5 [2] : vector<8x5x16xf32> to vector<8x5xf32>
    %17 = vector.shape_cast %16 : vector<8x5xf32> to vector<8x5x1xf32>
    %c0_6 = arith.constant 0 : index
    %c0_7 = arith.constant 0 : index
    %c0_8 = arith.constant 0 : index
    %18 = vector.load %arg3[%c0_6, %c0_7, %c0_8] : memref<1x5x1xi32, #tpu.memory_space<vmem>>, vector<1x5x1xi32>
    %19 = vector.shape_cast %18 : vector<1x5x1xi32> to vector<5x1xi32>
    %20 = vector.shape_cast %19 : vector<5x1xi32> to vector<1x5x1xi32>
    %21 = vector.broadcast %20 : vector<1x5x1xi32> to vector<8x5x16xi32>
    %22 = arith.cmpi eq, %11, %21 : vector<8x5x16xi32>
    %cst_9 = arith.constant 0.000000e+00 : f32
    %23 = vector.broadcast %cst_9 : f32 to vector<8x5x16xf32>
    %24 = arith.select %22, %1, %23 : vector<8x5x16xi1>, vector<8x5x16xf32>
    %cst_10 = arith.constant dense<0.000000e+00> : vector<8x5xf32>
    %25 = vector.multi_reduction <add>, %24, %cst_10 [2] : vector<8x5x16xf32> to vector<8x5xf32>
    %26 = vector.shape_cast %25 : vector<8x5xf32> to vector<8x5x1xf32>
    %27 = arith.subf %17, %10 : vector<8x5x1xf32>
    %28 = vector.shape_cast %27 : vector<8x5x1xf32> to vector<8x5xf32>
    %c0_11 = arith.constant 0 : index
    %c0_12 = arith.constant 0 : index
    %c0_13 = arith.constant 0 : index
    %29 = vector.load %arg4[%c0_11, %c0_12, %c0_13] : memref<1x8x5xf32, #tpu.memory_space<vmem>>, vector<1x8x5xf32>
    %30 = vector.shape_cast %29 : vector<1x8x5xf32> to vector<8x5xf32>
    %31 = vector.shape_cast %28 : vector<8x5xf32> to vector<1x8x5xf32>
    tpu.vector_store %arg4[%c0_11, %c0_12, %c0_13], %31 {strides = array<i32>} : memref<1x8x5xf32, #tpu.memory_space<vmem>>, vector<1x8x5xf32>,
    %32 = arith.subf %26, %10 : vector<8x5x1xf32>
    %33 = vector.shape_cast %32 : vector<8x5x1xf32> to vector<8x5xf32>
    %c0_14 = arith.constant 0 : index
    %c0_15 = arith.constant 0 : index
    %c0_16 = arith.constant 0 : index
    %34 = vector.load %arg5[%c0_14, %c0_15, %c0_16] : memref<1x8x5xf32, #tpu.memory_space<vmem>>, vector<1x8x5xf32>
    %35 = vector.shape_cast %34 : vector<1x8x5xf32> to vector<8x5xf32>
    %36 = vector.shape_cast %33 : vector<8x5xf32> to vector<1x8x5xf32>
    tpu.vector_store %arg5[%c0_14, %c0_15, %c0_16], %36 {strides = array<i32>} : memref<1x8x5xf32, #tpu.memory_space<vmem>>, vector<1x8x5xf32>,
    return
  }
  func.func @transform_0(%arg0: i32, %arg1: i32) -> (i32, i32, i32, i32) {
    %c0_i32 = arith.constant 0 : i32
    %c0_i32_0 = arith.constant 0 : i32
    %c0_i32_1 = arith.constant 0 : i32
    return %arg0, %arg1, %c0_i32, %c0_i32_0 : i32, i32, i32, i32
  }
  func.func @transform_1(%arg0: i32, %arg1: i32) -> (i32, i32, i32) {
    %c0_i32 = arith.constant 0 : i32
    %c0_i32_0 = arith.constant 0 : i32
    %c0_i32_1 = arith.constant 0 : i32
    return %arg0, %c0_i32, %c0_i32_0 : i32, i32, i32
  }
  func.func @transform_2(%arg0: i32, %arg1: i32) -> (i32, i32, i32) {
    %c0_i32 = arith.constant 0 : i32
    %c0_i32_0 = arith.constant 0 : i32
    return %arg0, %arg1, %c0_i32 : i32, i32, i32
  }
  func.func @transform_3(%arg0: i32, %arg1: i32) -> (i32, i32, i32) {
    %c0_i32 = arith.constant 0 : i32
    %c0_i32_0 = arith.constant 0 : i32
    return %arg0, %arg1, %c0_i32 : i32, i32, i32
  }
}

</mosaic_0001>

<llo_original>
// kernel: tpu_custom_call.1
$region0: #{tpu_custom_call.1}
  #allocation0 [shape = 'u32[]', space=smem, size = 0x4, offset = 0x4, fixed_abs, tag = 'smem constant byte address 0x4 - core index']
  #allocation1 [shape = 'u32[144,128]{1,0:T(1,128)}', space=vmem, size = 0x12000, scoped, tag = 'internal scratch']
  %s0 = inlined_call_operand.vmem [shape: f32[2,8,5,16], index: 0, kind: input, shape index: {}]
  %s1 = inlined_call_operand.vmem [shape: s32[2,5,1], index: 1, kind: input, shape index: {}]
  %s2 = inlined_call_operand.vmem [shape: f32[2,8,5], index: 2, kind: output, shape index: {0}]
  %s3 = inlined_call_operand.vmem [shape: f32[2,8,5], index: 3, kind: output, shape index: {1}]
  %4 = xla_tuple %s2, %s3
  %s5 = sld [smem:[#allocation0]]
  $region49: #{tpu_custom_call.1} parent=0
    _
  %s7 = ssub.s32 1, %s5
  %s8 = scalar_select 0, %s7, %s5
  loop: start=0, step=1, limit=4
  $region2: #{tpu_custom_call.1} parent=0 // loop_pre_header
    _
  $region3: #{tpu_custom_call.1} parent=0 // loop_header
    %s10 = sphi 0, %s14
    %p11 = scmp.ge.s32.totalorder %s10, 4
    %s17 = sphi 0, %s29
    %s18 = sphi 0, %s25
    %s19 = sphi 0, %s17
    %s20 = sphi 0, %s18
    %s21 = sphi 0, %s19
    %s22 = sphi 0, %s20
    %s34 = sphi 0, %s36
    %s37 = sphi 0, %s34
    %s38 = sphi 0, %s37
    %s54 = sphi 0, %s38
    %s60 = sphi 0, %s62
    %s63 = sphi 0, %s60
    %s64 = sphi 0, %s63
    %s80 = sphi 0, %s64
    %s88 = sphi 0, %s90
    %s91 = sphi 0, %s88
    %s92 = sphi 0, %s91
    %s108 = sphi 0, %s92
    %s116 = sphi 0, %s118
    %s119 = sphi 0, %s116
    %s120 = sphi 0, %s119
    %s136 = sphi 0, %s120
  $region4: #{tpu_custom_call.1} parent=0 // loop_header_branch
    %13 = sbr.rel (%p11) target = $region8
  $region5: #{tpu_custom_call.1} parent=0 // loop_body
    %s15 = ssub.s32 %s10, 1
    %s16 = ssub.s32 %s10, 2
    %s23 = sadd.s32 1, %s18
    %p24 = scmp.ge.s32.totalorder %s23, 1
    %s25 = scalar_select %p24, 0, %s23
    %s26 = sadd.s32 1, %s17
    %s27 = scalar_select %p24, %s26, %s17
    %p28 = scmp.ge.s32.totalorder %s27, 2
    %s29 = scalar_select %p28, 0, %s27
    %s30 = ssub.s32 %s17, %s29
    %s31 = ssub.s32 %s18, %s25
    %s32 = sor.u32 %s30, %s31
    %p33 = scmp.eq.s32.totalorder %s32, 0
    %s35 = sadd.s32 %s34, 1
    %s36 = scalar_select %p33, %s34, %s35
    %p39 = pneg %p33
    %p40 = scmp.eq.s32.totalorder %s10, 1
    %p41 = por %p39, %p40
    %p42 = scmp.ne.s32.totalorder %s34, %s37
    %p43 = scmp.eq.s32.totalorder %s10, 0
    %p44 = por %p42, %p43
    %p45 = scmp.ne.s32.totalorder %s34, %s37
    %p46 = scmp.eq.s32.totalorder %s15, 1
    %p47 = por %p45, %p46
    %p48 = scmp.ne.s32.totalorder %s37, %s38
    %p49 = scmp.eq.s32.totalorder %s15, 0
    %p50 = por %p48, %p49
    %p51 = scmp.ne.s32.totalorder %s37, %s38
    %p52 = scmp.eq.s32.totalorder %s16, 1
    %p53 = por %p51, %p52
    %p55 = scmp.ne.s32.totalorder %s38, %s54
    %p56 = scmp.eq.s32.totalorder %s16, 0
    %p57 = por %p55, %p56
    %s58 = ssub.s32 %s17, %s29
    %p59 = scmp.eq.s32.totalorder %s58, 0
    %s61 = sadd.s32 %s60, 1
    %s62 = scalar_select %p59, %s60, %s61
    %p65 = pneg %p59
    %p66 = scmp.eq.s32.totalorder %s10, 1
    %p67 = por %p65, %p66
    %p68 = scmp.ne.s32.totalorder %s60, %s63
    %p69 = scmp.eq.s32.totalorder %s10, 0
    %p70 = por %p68, %p69
    %p71 = scmp.ne.s32.totalorder %s60, %s63
    %p72 = scmp.eq.s32.totalorder %s15, 1
    %p73 = por %p71, %p72
    %p74 = scmp.ne.s32.totalorder %s63, %s64
    %p75 = scmp.eq.s32.totalorder %s15, 0
    %p76 = por %p74, %p75
    %p77 = scmp.ne.s32.totalorder %s63, %s64
    %p78 = scmp.eq.s32.totalorder %s16, 1
    %p79 = por %p77, %p78
    %p81 = scmp.ne.s32.totalorder %s64, %s80
    %p82 = scmp.eq.s32.totalorder %s16, 0
    %p83 = por %p81, %p82
    %s84 = ssub.s32 %s17, %s29
    %s85 = ssub.s32 %s18, %s25
    %s86 = sor.u32 %s84, %s85
    %p87 = scmp.eq.s32.totalorder %s86, 0
    %s89 = sadd.s32 %s88, 1
    %s90 = scalar_select %p87, %s88, %s89
    %p93 = pneg %p87
    %p94 = scmp.eq.s32.totalorder %s10, 1
    %p95 = por %p93, %p94
    %p96 = scmp.ne.s32.totalorder %s88, %s91
    %p97 = scmp.eq.s32.totalorder %s10, 0
    %p98 = por %p96, %p97
    %p99 = scmp.ne.s32.totalorder %s88, %s91
    %p100 = scmp.eq.s32.totalorder %s15, 1
    %p101 = por %p99, %p100
    %p102 = scmp.ne.s32.totalorder %s91, %s92
    %p103 = scmp.eq.s32.totalorder %s15, 0
    %p104 = por %p102, %p103
    %p105 = scmp.ne.s32.totalorder %s91, %s92
    %p106 = scmp.eq.s32.totalorder %s16, 1
    %p107 = por %p105, %p106
    %p109 = scmp.ne.s32.totalorder %s92, %s108
    %p110 = scmp.eq.s32.totalorder %s16, 0
    %p111 = por %p109, %p110
    %s112 = ssub.s32 %s17, %s29
    %s113 = ssub.s32 %s18, %s25
    %s114 = sor.u32 %s112, %s113
    %p115 = scmp.eq.s32.totalorder %s114, 0
    %s117 = sadd.s32 %s116, 1
    %s118 = scalar_select %p115, %s116, %s117
    %p121 = pneg %p115
    %p122 = scmp.eq.s32.totalorder %s10, 1
    %p123 = por %p121, %p122
    %p124 = scmp.ne.s32.totalorder %s116, %s119
    %p125 = scmp.eq.s32.totalorder %s10, 0
    %p126 = por %p124, %p125
    %p127 = scmp.ne.s32.totalorder %s116, %s119
    %p128 = scmp.eq.s32.totalorder %s15, 1
    %p129 = por %p127, %p128
    %p130 = scmp.ne.s32.totalorder %s119, %s120
    %p131 = scmp.eq.s32.totalorder %s15, 0
    %p132 = por %p130, %p131
    %p133 = scmp.ne.s32.totalorder %s119, %s120
    %p134 = scmp.eq.s32.totalorder %s16, 1
    %p135 = por %p133, %p134
    %p137 = scmp.ne.s32.totalorder %s120, %s136
    %p138 = scmp.eq.s32.totalorder %s16, 0
    %p139 = por %p137, %p138
    %p140 = scmp.le.s32.totalorder 1, %s10
    %p141 = scmp.lt.s32.totalorder %s10, 3
    %p142 = pnand %p140, %p141
    %p143 = pneg %p142
    // Predicated region
    $region9: #{tpu_custom_call.1} parent=5 // pred_check
      _
    $region10: #{tpu_custom_call.1} parent=5 // pred_check_branch
      %145 = sbr.rel (%p142) target = $region12
    $region11: #{tpu_custom_call.1} parent=5 // pred_region
      %s146 = ssub.s32 %s10, 1
    $region12: #{tpu_custom_call.1} parent=5 // pred_fallthru
      _
    %p147 = scmp.lt.s32.totalorder %s10, 2
    // Predicated region
    $region13: #{tpu_custom_call.1} parent=5 // pred_check
      %p148 = pneg %p147
    $region14: #{tpu_custom_call.1} parent=5 // pred_check_branch
      %150 = sbr.rel (%p148) target = $region16
    $region15: #{tpu_custom_call.1} parent=5 // pred_region
      // Predicated region
      $region17: #{tpu_custom_call.1} parent=15 // pred_check
        %p151 = pneg %p44
      $region18: #{tpu_custom_call.1} parent=15 // pred_check_branch
        %153 = sbr.rel (%p151) target = $region20
      $region19: #{tpu_custom_call.1} parent=15 // pred_region
        %s154 = smul.u32 8, %s18
        %p155 = scmp.lt.s32.totalorder %s17, 1
        %s156 = scalar_select %p155, %s17, 1
        %p157 = scmp.lt.s32.totalorder %s154, 7
        %s158 = scalar_select %p157, %s154, 7
        %s159 = smul.addr %s156, 8
        %s160 = sadd.s32 %s158, %s159
        %s161 = smul.addr %s160, 8
        %s162 = scalar_lea.vmem %s0, %s161
        %s163 = smul.u32 8, %s18
      $region20: #{tpu_custom_call.1} parent=15 // pred_fallthru
        _
      // Predicated region
      $region21: #{tpu_custom_call.1} parent=15 // pred_check
        %p164 = pneg %p70
      $region22: #{tpu_custom_call.1} parent=15 // pred_check_branch
        %166 = sbr.rel (%p164) target = $region24
      $region23: #{tpu_custom_call.1} parent=15 // pred_region
        %p167 = scmp.lt.s32.totalorder %s17, 1
        %s168 = scalar_select %p167, %s17, 1
        %s169 = smul.addr %s168, 8
        %s170 = scalar_lea.vmem %s1, %s169
      $region24: #{tpu_custom_call.1} parent=15 // pred_fallthru
        _
    $region16: #{tpu_custom_call.1} parent=5 // pred_fallthru
      _
    %p171 = scmp.le.s32.totalorder 1, %s10
    %p172 = scmp.lt.s32.totalorder %s10, 3
    %p173 = pnand %p171, %p172
    %p174 = pneg %p173
    // Predicated region
    $region25: #{tpu_custom_call.1} parent=5 // pred_check
      _
    $region26: #{tpu_custom_call.1} parent=5 // pred_check_branch
      %176 = sbr.rel (%p173) target = $region28
    $region27: #{tpu_custom_call.1} parent=5 // pred_region
      %s177 = ssub.s32 %s10, 1
      %s178 = smul.u32 8, %s20
      %p179 = scmp.lt.s32.totalorder %s19, 1
      %s180 = scalar_select %p179, %s19, 1
      %p181 = scmp.lt.s32.totalorder %s178, 7
      %s182 = scalar_select %p181, %s178, 7
      %s183 = smul.addr %s180, 8
      %s184 = sadd.s32 %s182, %s183
      %s185 = smul.addr %s184, 8
      %s186 = scalar_lea.vmem %s0, %s185
      %p187 = pneg %p50
      %p188 = pneg %p47
      %p189 = scmp.lt.s32.totalorder %s19, 1
      %s190 = scalar_select %p189, %s19, 1
      %s191 = smul.addr %s190, 8
      %s192 = scalar_lea.vmem %s1, %s191
      %p193 = pneg %p76
      %p194 = pneg %p73
      %p195 = pneg %p104
      %p196 = pneg %p101
      %p197 = scmp.lt.s32.totalorder %s19, 1
      %s198 = scalar_select %p197, %s19, 1
      %p199 = scmp.lt.s32.totalorder %s20, 0
      %s200 = scalar_select %p199, %s20, 0
      %s201 = sadd.s32 %s200, %s198
      %s202 = smul.addr %s201, 8
      %s203 = scalar_lea.vmem %s2, %s202
      %p204 = pneg %p132
      %p205 = pneg %p129
      %p206 = scmp.lt.s32.totalorder %s19, 1
      %s207 = scalar_select %p206, %s19, 1
      %p208 = scmp.lt.s32.totalorder %s20, 0
      %s209 = scalar_select %p208, %s20, 0
      %s210 = sadd.s32 %s209, %s207
      %s211 = smul.addr %s210, 8
      %s212 = scalar_lea.vmem %s3, %s211
      %s213 = smul.u32 8, %s20
      %p214 = scmp.lt.s32.totalorder %s19, 1
      %s215 = scalar_select %p214, %s19, 1
      %p216 = scmp.lt.s32.totalorder %s213, 7
      %s217 = scalar_select %p216, %s213, 7
      %s218 = smul.addr %s215, 8
      %s219 = sadd.s32 %s217, %s218
      %s220 = smul.addr %s219, 8
      %s221 = scalar_lea.vmem %s0, %s220
      %s222 = smul.u32 8, %s20
      %p223 = scmp.lt.s32.totalorder %s19, 1
      %s224 = scalar_select %p223, %s19, 1
      %s225 = smul.addr %s224, 8
      %s226 = scalar_lea.vmem %s1, %s225
      %p227 = scmp.lt.s32.totalorder %s19, 1
      %s228 = scalar_select %p227, %s19, 1
      %p229 = scmp.lt.s32.totalorder %s20, 0
      %s230 = scalar_select %p229, %s20, 0
      %s231 = sadd.s32 %s230, %s228
      %s232 = smul.addr %s231, 8
      %s233 = scalar_lea.vmem %s2, %s232
      %p234 = scmp.lt.s32.totalorder %s19, 1
      %s235 = scalar_select %p234, %s19, 1
      %p236 = scmp.lt.s32.totalorder %s20, 0
      %s237 = scalar_select %p236, %s20, 0
      %s238 = sadd.s32 %s237, %s235
      %s239 = smul.addr %s238, 8
      %s240 = scalar_lea.vmem %s3, %s239
      %v241 = vld [vmem:[%s221] sm:$0x1f]
      %v242 = vld [vmem:[%s221 + $0x8] sm:$0x1f]
      %v243 = vld [vmem:[%s221 + $0x10] sm:$0x1f]
      %v244 = vld [vmem:[%s221 + $0x18] sm:$0x1f]
      %v245 = vld [vmem:[%s221 + $0x20] sm:$0x1f]
      %v246 = vld [vmem:[%s221 + $0x28] sm:$0x1f]
      %v247 = vld [vmem:[%s221 + $0x30] sm:$0x1f]
      %v248 = vld [vmem:[%s221 + $0x38] sm:$0x1f]
      %vm249 = vcmask 126976
      %v250 = vsel %vm249, %v241, -inf
      %251 = vmax.xlane.f32.xlu0 %v250
      %v252 = vpop.xlane.xlu0 %251
      %v253 = vsel %vm249, %v242, -inf
      %254 = vmax.xlane.f32.xlu0 %v253
      %v255 = vpop.xlane.xlu0 %254
      %v256 = vsel %vm249, %v243, -inf
      %257 = vmax.xlane.f32.xlu0 %v256
      %v258 = vpop.xlane.xlu0 %257
      %v259 = vsel %vm249, %v244, -inf
      %260 = vmax.xlane.f32.xlu0 %v259
      %v261 = vpop.xlane.xlu0 %260
      %v262 = vsel %vm249, %v245, -inf
      %263 = vmax.xlane.f32.xlu0 %v262
      %v264 = vpop.xlane.xlu0 %263
      %v265 = vsel %vm249, %v246, -inf
      %266 = vmax.xlane.f32.xlu0 %v265
      %v267 = vpop.xlane.xlu0 %266
      %v268 = vsel %vm249, %v247, -inf
      %269 = vmax.xlane.f32.xlu0 %v268
      %v270 = vpop.xlane.xlu0 %269
      %v271 = vsel %vm249, %v248, -inf
      %272 = vmax.xlane.f32.xlu0 %v271
      %v273 = vpop.xlane.xlu0 %272
      %v274 = vsub.f32 %v241, %v252
      %v275 = vsub.f32 %v242, %v255
      %v276 = vsub.f32 %v243, %v258
      %v277 = vsub.f32 %v244, %v261
      %v278 = vsub.f32 %v245, %v264
      %v279 = vsub.f32 %v246, %v267
      %v280 = vsub.f32 %v247, %v270
      %v281 = vsub.f32 %v248, %v273
      %v282 = vmul.f32 %v274, 1.442695
      %v283 = vpow.pop %v282
      %v284 = vmul.f32 %v275, 1.442695
      %v285 = vpow.pop %v284
      %v286 = vmul.f32 %v276, 1.442695
      %v287 = vpow.pop %v286
      %v288 = vmul.f32 %v277, 1.442695
      %v289 = vpow.pop %v288
      %v290 = vmul.f32 %v278, 1.442695
      %v291 = vpow.pop %v290
      %v292 = vmul.f32 %v279, 1.442695
      %v293 = vpow.pop %v292
      %v294 = vmul.f32 %v280, 1.442695
      %v295 = vpow.pop %v294
      %v296 = vmul.f32 %v281, 1.442695
      %v297 = vpow.pop %v296
      %v298 = vsel %vm249, %v283, 0.0
      %299 = vadd.xlane.f32.xlu0 %v298
      %v300 = vpop.xlane.xlu0 %299
      %v301 = vsel %vm249, %v285, 0.0
      %302 = vadd.xlane.f32.xlu0 %v301
      %v303 = vpop.xlane.xlu0 %302
      %v304 = vsel %vm249, %v287, 0.0
      %305 = vadd.xlane.f32.xlu0 %v304
      %v306 = vpop.xlane.xlu0 %305
      %v307 = vsel %vm249, %v289, 0.0
      %308 = vadd.xlane.f32.xlu0 %v307
      %v309 = vpop.xlane.xlu0 %308
      %v310 = vsel %vm249, %v291, 0.0
      %311 = vadd.xlane.f32.xlu0 %v310
      %v312 = vpop.xlane.xlu0 %311
      %v313 = vsel %vm249, %v293, 0.0
      %314 = vadd.xlane.f32.xlu0 %v313
      %v315 = vpop.xlane.xlu0 %314
      %v316 = vsel %vm249, %v295, 0.0
      %317 = vadd.xlane.f32.xlu0 %v316
      %v318 = vpop.xlane.xlu0 %317
      %v319 = vsel %vm249, %v297, 0.0
      %320 = vadd.xlane.f32.xlu0 %v319
      %v321 = vpop.xlane.xlu0 %320
      %v322 = vlog2.pop %v300
      %v323 = vmul.f32 %v322, 0.6931472
      %v324 = vlog2.pop %v303
      %v325 = vmul.f32 %v324, 0.6931472
      %v326 = vlog2.pop %v306
      %v327 = vmul.f32 %v326, 0.6931472
      %v328 = vlog2.pop %v309
      %v329 = vmul.f32 %v328, 0.6931472
      %v330 = vlog2.pop %v312
      %v331 = vmul.f32 %v330, 0.6931472
      %v332 = vlog2.pop %v315
      %v333 = vmul.f32 %v332, 0.6931472
      %v334 = vlog2.pop %v318
      %v335 = vmul.f32 %v334, 0.6931472
      %v336 = vlog2.pop %v321
      %v337 = vmul.f32 %v336, 0.6931472
      %v338 = vadd.f32 %v323, %v252
      %v339 = vadd.f32 %v325, %v255
      %v340 = vadd.f32 %v327, %v258
      %v341 = vadd.f32 %v329, %v261
      %v342 = vadd.f32 %v331, %v264
      %v343 = vadd.f32 %v333, %v267
      %v344 = vadd.f32 %v335, %v270
      %v345 = vadd.f32 %v337, %v273
      %v346 = vlaneseq
      %v347 = vand.u32 %v346, 127
      %vm348 = vcmp.eq.s32.totalorder %v347, 15
      %v349 = vsel %vm348, %v241, 0.0
      %v350 = vsel %vm348, %v242, 0.0
      %v351 = vsel %vm348, %v243, 0.0
      %v352 = vsel %vm348, %v244, 0.0
      %v353 = vsel %vm348, %v245, 0.0
      %v354 = vsel %vm348, %v246, 0.0
      %v355 = vsel %vm348, %v247, 0.0
      %v356 = vsel %vm348, %v248, 0.0
      %v357 = vsel %vm249, %v349, 0.0
      %358 = vadd.xlane.f32.xlu0 %v357
      %v359 = vpop.xlane.xlu0 %358
      %v360 = vsel %vm249, %v350, 0.0
      %361 = vadd.xlane.f32.xlu0 %v360
      %v362 = vpop.xlane.xlu0 %361
      %v363 = vsel %vm249, %v351, 0.0
      %364 = vadd.xlane.f32.xlu0 %v363
      %v365 = vpop.xlane.xlu0 %364
      %v366 = vsel %vm249, %v352, 0.0
      %367 = vadd.xlane.f32.xlu0 %v366
      %v368 = vpop.xlane.xlu0 %367
      %v369 = vsel %vm249, %v353, 0.0
      %370 = vadd.xlane.f32.xlu0 %v369
      %v371 = vpop.xlane.xlu0 %370
      %v372 = vsel %vm249, %v354, 0.0
      %373 = vadd.xlane.f32.xlu0 %v372
      %v374 = vpop.xlane.xlu0 %373
      %v375 = vsel %vm249, %v355, 0.0
      %376 = vadd.xlane.f32.xlu0 %v375
      %v377 = vpop.xlane.xlu0 %376
      %v378 = vsel %vm249, %v356, 0.0
      %379 = vadd.xlane.f32.xlu0 %v378
      %v380 = vpop.xlane.xlu0 %379
      %v381 = vld [vmem:[%s226] sm:$0x1f]
      %382 = vset.pattern.permute.xlu0 0
      %383 = vperm.xlu0 %382, %v381
      %v384 = vpop.permute.xlu0 %383
      %vm385 = vcmp.eq.s32.totalorder %v347, %v384
      %v386 = vsel %vm385, %v241, 0.0
      %v387 = vsel %vm385, %v242, 0.0
      %v388 = vsel %vm385, %v243, 0.0
      %v389 = vsel %vm385, %v244, 0.0
      %v390 = vsel %vm385, %v245, 0.0
      %v391 = vsel %vm385, %v246, 0.0
      %v392 = vsel %vm385, %v247, 0.0
      %v393 = vsel %vm385, %v248, 0.0
      %v394 = vsel %vm249, %v386, 0.0
      %395 = vadd.xlane.f32.xlu0 %v394
      %v396 = vpop.xlane.xlu0 %395
      %v397 = vsel %vm249, %v387, 0.0
      %398 = vadd.xlane.f32.xlu0 %v397
      %v399 = vpop.xlane.xlu0 %398
      %v400 = vsel %vm249, %v388, 0.0
      %401 = vadd.xlane.f32.xlu0 %v400
      %v402 = vpop.xlane.xlu0 %401
      %v403 = vsel %vm249, %v389, 0.0
      %404 = vadd.xlane.f32.xlu0 %v403
      %v405 = vpop.xlane.xlu0 %404
      %v406 = vsel %vm249, %v390, 0.0
      %407 = vadd.xlane.f32.xlu0 %v406
      %v408 = vpop.xlane.xlu0 %407
      %v409 = vsel %vm249, %v391, 0.0
      %410 = vadd.xlane.f32.xlu0 %v409
      %v411 = vpop.xlane.xlu0 %410
      %v412 = vsel %vm249, %v392, 0.0
      %413 = vadd.xlane.f32.xlu0 %v412
      %v414 = vpop.xlane.xlu0 %413
      %v415 = vsel %vm249, %v393, 0.0
      %416 = vadd.xlane.f32.xlu0 %v415
      %v417 = vpop.xlane.xlu0 %416
      %v418 = vsub.f32 %v359, %v338
      %v419 = vsub.f32 %v362, %v339
      %v420 = vsub.f32 %v365, %v340
      %v421 = vsub.f32 %v368, %v341
      %v422 = vsub.f32 %v371, %v342
      %v423 = vsub.f32 %v374, %v343
      %v424 = vsub.f32 %v377, %v344
      %v425 = vsub.f32 %v380, %v345
      %v434 = vlaneseq
      %v435 = vshrl.u32 %v434, 7
      %v436 = vsub.s32 %v347, %v435
      %v437 = vrot.slane %v418, %v436
      %v438 = vlaneseq
      %v439 = vshrl.u32 %v438, 7
      %v440 = vsub.s32 %v347, %v439
      %v441 = vrot.slane %v419, %v440
      %v442 = vlaneseq
      %v443 = vshrl.u32 %v442, 7
      %v444 = vsub.s32 %v347, %v443
      %v445 = vrot.slane %v420, %v444
      %v446 = vlaneseq
      %v447 = vshrl.u32 %v446, 7
      %v448 = vsub.s32 %v347, %v447
      %v449 = vrot.slane %v421, %v448
      %v450 = vlaneseq
      %v451 = vshrl.u32 %v450, 7
      %v452 = vsub.s32 %v347, %v451
      %v453 = vrot.slane %v422, %v452
      %v454 = vlaneseq
      %v455 = vshrl.u32 %v454, 7
      %v456 = vsub.s32 %v347, %v455
      %v457 = vrot.slane %v423, %v456
      %v458 = vlaneseq
      %v459 = vshrl.u32 %v458, 7
      %v460 = vsub.s32 %v347, %v459
      %v461 = vrot.slane %v424, %v460
      %v462 = vlaneseq
      %v463 = vshrl.u32 %v462, 7
      %v464 = vsub.s32 %v347, %v463
      %v465 = vrot.slane %v425, %v464
      %vm466 = vcmask 1041409
      %v467 = vsel %vm466, %v441, %v437
      %vm468 = vcmask 1042434
      %v469 = vsel %vm468, %v445, %v467
      %vm470 = vcmask 1043459
      %v471 = vsel %vm470, %v449, %v469
      %vm472 = vcmask 1044484
      %v473 = vsel %vm472, %v453, %v471
      %vm474 = vcmask 1045509
      %v475 = vsel %vm474, %v457, %v473
      %vm476 = vcmask 1046534
      %v477 = vsel %vm476, %v461, %v475
      %vm478 = vcmask 1047559
      %v479 = vsel %vm478, %v465, %v477
      %vm481 = vcmask 39936
      %482 = vst.msk [vmem:[%s233] sm:$0xff] %vm481, %v479
      %v483 = vsub.f32 %v396, %v338
      %v484 = vsub.f32 %v399, %v339
      %v485 = vsub.f32 %v402, %v340
      %v486 = vsub.f32 %v405, %v341
      %v487 = vsub.f32 %v408, %v342
      %v488 = vsub.f32 %v411, %v343
      %v489 = vsub.f32 %v414, %v344
      %v490 = vsub.f32 %v417, %v345
      %v499 = vlaneseq
      %v500 = vshrl.u32 %v499, 7
      %v501 = vsub.s32 %v347, %v500
      %v502 = vrot.slane %v483, %v501
      %v503 = vlaneseq
      %v504 = vshrl.u32 %v503, 7
      %v505 = vsub.s32 %v347, %v504
      %v506 = vrot.slane %v484, %v505
      %v507 = vlaneseq
      %v508 = vshrl.u32 %v507, 7
      %v509 = vsub.s32 %v347, %v508
      %v510 = vrot.slane %v485, %v509
      %v511 = vlaneseq
      %v512 = vshrl.u32 %v511, 7
      %v513 = vsub.s32 %v347, %v512
      %v514 = vrot.slane %v486, %v513
      %v515 = vlaneseq
      %v516 = vshrl.u32 %v515, 7
      %v517 = vsub.s32 %v347, %v516
      %v518 = vrot.slane %v487, %v517
      %v519 = vlaneseq
      %v520 = vshrl.u32 %v519, 7
      %v521 = vsub.s32 %v347, %v520
      %v522 = vrot.slane %v488, %v521
      %v523 = vlaneseq
      %v524 = vshrl.u32 %v523, 7
      %v525 = vsub.s32 %v347, %v524
      %v526 = vrot.slane %v489, %v525
      %v527 = vlaneseq
      %v528 = vshrl.u32 %v527, 7
      %v529 = vsub.s32 %v347, %v528
      %v530 = vrot.slane %v490, %v529
      %v531 = vsel %vm466, %v506, %v502
      %v532 = vsel %vm468, %v510, %v531
      %v533 = vsel %vm470, %v514, %v532
      %v534 = vsel %vm472, %v518, %v533
      %v535 = vsel %vm474, %v522, %v534
      %v536 = vsel %vm476, %v526, %v535
      %v537 = vsel %vm478, %v530, %v536
      %539 = vst.msk [vmem:[%s240] sm:$0xff] %vm481, %v537
      %p540 = scmp.lt.s32.totalorder %s19, 1
      %s541 = scalar_select %p540, %s19, 1
      %p542 = scmp.lt.s32.totalorder %s20, 0
      %s543 = scalar_select %p542, %s20, 0
      %s544 = sadd.s32 %s543, %s541
      %s545 = smul.addr %s544, 8
      %s546 = scalar_lea.vmem %s2, %s545
      %p547 = scmp.lt.s32.totalorder %s19, 1
      %s548 = scalar_select %p547, %s19, 1
      %p549 = scmp.lt.s32.totalorder %s20, 0
      %s550 = scalar_select %p549, %s20, 0
      %s551 = sadd.s32 %s550, %s548
      %s552 = smul.addr %s551, 8
      %s553 = scalar_lea.vmem %s3, %s552
      // Predicated region
      $region29: #{tpu_custom_call.1} parent=27 // pred_check
        %p554 = pneg %p101
      $region30: #{tpu_custom_call.1} parent=27 // pred_check_branch
        %556 = sbr.rel (%p554) target = $region32
      $region31: #{tpu_custom_call.1} parent=27 // pred_region
        _
      $region32: #{tpu_custom_call.1} parent=27 // pred_fallthru
        _
      // Predicated region
      $region33: #{tpu_custom_call.1} parent=27 // pred_check
        %p557 = pneg %p129
      $region34: #{tpu_custom_call.1} parent=27 // pred_check_branch
        %559 = sbr.rel (%p557) target = $region36
      $region35: #{tpu_custom_call.1} parent=27 // pred_region
        _
      $region36: #{tpu_custom_call.1} parent=27 // pred_fallthru
        _
    $region28: #{tpu_custom_call.1} parent=5 // pred_fallthru
      _
    %p560 = scmp.le.s32.totalorder 2, %s10
    // Predicated region
    $region37: #{tpu_custom_call.1} parent=5 // pred_check
      %p561 = pneg %p560
    $region38: #{tpu_custom_call.1} parent=5 // pred_check_branch
      %563 = sbr.rel (%p561) target = $region40
    $region39: #{tpu_custom_call.1} parent=5 // pred_region
      %s564 = ssub.s32 %s10, 2
      // Predicated region
      $region41: #{tpu_custom_call.1} parent=39 // pred_check
        %p565 = pneg %p107
      $region42: #{tpu_custom_call.1} parent=39 // pred_check_branch
        %567 = sbr.rel (%p565) target = $region44
      $region43: #{tpu_custom_call.1} parent=39 // pred_region
        %p568 = scmp.lt.s32.totalorder %s21, 1
        %s569 = scalar_select %p568, %s21, 1
        %p570 = scmp.lt.s32.totalorder %s22, 0
        %s571 = scalar_select %p570, %s22, 0
        %s572 = sadd.s32 %s571, %s569
        %s573 = smul.addr %s572, 8
        %s574 = scalar_lea.vmem %s2, %s573
      $region44: #{tpu_custom_call.1} parent=39 // pred_fallthru
        _
      // Predicated region
      $region45: #{tpu_custom_call.1} parent=39 // pred_check
        %p575 = pneg %p135
      $region46: #{tpu_custom_call.1} parent=39 // pred_check_branch
        %577 = sbr.rel (%p575) target = $region48
      $region47: #{tpu_custom_call.1} parent=39 // pred_region
        %p578 = scmp.lt.s32.totalorder %s21, 1
        %s579 = scalar_select %p578, %s21, 1
        %p580 = scmp.lt.s32.totalorder %s22, 0
        %s581 = scalar_select %p580, %s22, 0
        %s582 = sadd.s32 %s581, %s579
        %s583 = smul.addr %s582, 8
        %s584 = scalar_lea.vmem %s3, %s583
      $region48: #{tpu_custom_call.1} parent=39 // pred_fallthru
        _
    $region40: #{tpu_custom_call.1} parent=5 // pred_fallthru
      _
  $region6: #{tpu_custom_call.1} parent=0 // loop_footer
    %s14 = sadd.s32 1, %s10
  $region7: #{tpu_custom_call.1} parent=0 // loop_footer_branch
    %9 = sbr.rel target = $region3
  $region8: #{tpu_custom_call.1} parent=0 // loop_exit
    _

</llo_original>
